<compile_context>
chip_gen: v7x
topology: tpu7x:2x2x1
jax: 0.10.0
libtpu: 0.0.40
codegen_flags: <defaults>
</compile_context>

<pallas_src>
import functools
import math

import jax
import jax.numpy as jnp
from jax import lax
from jax.experimental import pallas as pl
from jax.experimental.pallas import tpu as pltpu

_INV_SQRT2 = 1.0 / math.sqrt(2.0)
_TANH_C = math.sqrt(2.0 / math.pi)


def _ffn_kernel(x_ref, w1_ref, b1_ref, w2_ref, b2_ref, o_ref, *, approx_gelu):
    """One tile of token rows: two MXU matmuls + GELU.

    x_ref  : [tm, H]   native input dtype (cast to bf16 in-kernel)
    w1_ref : [H, I]    compute dtype (bf16), resident across the grid
    b1_ref : [1, I]    f32
    w2_ref : [I, Hp]   compute dtype (bf16), resident (output-lane padded)
    b2_ref : [1, Hp]   f32
    o_ref  : [tm, Hp]  input dtype
    """
    # In-kernel cast of the streamed x tile (cheap VPU op hidden under the
    # MXU) -> MXU runs its native bf16 path with f32 accumulation.
    x = x_ref[...].astype(w1_ref.dtype)

    # linear1: MXU matmul, f32 accumulation, f32 bias add.
    h = jnp.dot(x, w1_ref[...], preferred_element_type=jnp.float32)
    h = h + b1_ref[...]

    if approx_gelu:
        # tanh-approximation (lower VALU/EUP pressure; slightly different numerics).
        a = 0.5 * h * (1.0 + jnp.tanh(_TANH_C * (h + 0.044715 * h * h * h)))
    else:
        # Exact GELU, matching torch.erf semantics.
        a = h * (0.5 * (1.0 + lax.erf(h * _INV_SQRT2)))

    # linear2: cast activation to weight dtype for the bf16 MXU path,
    # accumulate in f32, f32 bias add.
    out = jnp.dot(a.astype(w2_ref.dtype), w2_ref[...],
                  preferred_element_type=jnp.float32)
    out = out + b2_ref[...]
    o_ref[...] = out.astype(o_ref.dtype)


def _round_up(x, m):
    return (x + m - 1) // m * m


def _pick_tile_m(m, requested):
    """Sublane-aligned token tile <= requested; prefer an even grid count.

    An even number of grid steps lets dimension_semantics=("parallel",) split
    the token axis evenly across v7x's two TensorCores.
    """
    tm = min(requested, _round_up(m, 8))
    tm = max(8, (tm // 8) * 8)
    grid = -(-m // tm)
    if grid % 2 == 1 and tm >= 16:
        half = max(8, ((tm // 2) // 8) * 8)
        # Only shrink the tile when it stays MXU-sized (>=128 rows) or when
        # we'd otherwise have a single step (one TC idle on v7x).
        if (half >= 128 or grid == 1) and (-(-m // half)) % 2 == 0:
            tm = half
    return tm


def _vmem_limit_bytes(fraction=0.875, fallback=64 << 20):
    """Generation-aware scoped-VMEM budget (~87.5% of physical capacity)."""
    try:
        cap = int(pltpu.get_tpu_info().vmem_capacity_bytes)
        if cap <= 0:
            raise ValueError("bad vmem capacity")
    except Exception:  # pragma: no cover - conservative fallback
        cap = fallback
    return int(cap * fraction)


def prepare_ffn_params(w1, b1, w2, b2, *, compute_dtype=jnp.bfloat16):
    """One-time weight preparation (keep this OUT of the per-call path).

    - Casts W1/W2 to the MXU-native compute dtype (bf16 at rest).
    - Lane-pads W2's output columns and b2 to a multiple of 128 so the
      kernel's output stores are dense (unmasked vst).
    """
    H, I = w1.shape
    assert w2.shape == (I, H) and b1.shape == (I,) and b2.shape == (H,)
    Hp = _round_up(H, 128)

    w1c = w1.astype(compute_dtype)
    w2c = w2.astype(compute_dtype)
    b2f = b2.astype(jnp.float32)
    if Hp != H:
        w2c = jnp.pad(w2c, ((0, 0), (0, Hp - H)))
        b2f = jnp.pad(b2f, (0, Hp - H))
    return dict(
        w1=w1c,
        b1=b1.astype(jnp.float32).reshape(1, I),
        w2=w2c,
        b2=b2f.reshape(1, Hp),
        hidden=H,
        hidden_padded=Hp,
        intermediate=I,
    )


def feed_forward(x, params, *, tile_m=512, approx_gelu=False, interpret=False):
    """x: [B, S, H]; params from prepare_ffn_params -> [B, S, H]."""
    B, S, H = x.shape
    assert H == params["hidden"]
    I = params["intermediate"]
    Hp = params["hidden_padded"]
    M = B * S

    tm = _pick_tile_m(M, tile_m)
    Mp = _round_up(M, tm)
    grid_m = Mp // tm

    # Stream x in its native dtype (cast happens in-kernel); pad token rows so
    # every grid step is a full, sublane-aligned tile and the pipeline / v7x
    # dual-TC sharding stay engaged.
    x2d = x.reshape(M, H)
    if Mp != M:
        x2d = jnp.pad(x2d, ((0, Mp - M), (0, 0)))

    vmem_limit = _vmem_limit_bytes()
    kernel = functools.partial(_ffn_kernel, approx_gelu=approx_gelu)
    out_shape = jax.ShapeDtypeStruct((Mp, Hp), x.dtype)

    def build(weight_buffers):
        # weight_buffers=1 -> single-buffer grid-resident operands (constant
        # index_map, so extra buffers are pure VMEM waste). None -> default.
        resident = {}
        if weight_buffers is not None:
            resident = dict(pipeline_mode=pl.Buffered(weight_buffers))
        in_specs = [
            pl.BlockSpec((tm, H), lambda i: (i, 0)),               # x (streamed)
            pl.BlockSpec((H, I), lambda i: (0, 0), **resident),    # W1 (resident)
            pl.BlockSpec((1, I), lambda i: (0, 0), **resident),    # b1
            pl.BlockSpec((I, Hp), lambda i: (0, 0), **resident),   # W2 (resident)
            pl.BlockSpec((1, Hp), lambda i: (0, 0), **resident),   # b2
        ]
        return pl.pallas_call(
            kernel,
            out_shape=out_shape,
            grid_spec=pltpu.PrefetchScalarGridSpec(
                num_scalar_prefetch=0,
                grid=(grid_m,),
                in_specs=in_specs,
                out_specs=pl.BlockSpec((tm, Hp), lambda i: (i, 0)),
            ),
            compiler_params=pltpu.CompilerParams(
                dimension_semantics=("parallel",),
                vmem_limit_bytes=vmem_limit,
            ),
            interpret=interpret,
        )

    args = (x2d, params["w1"], params["b1"], params["w2"], params["b2"])
    try:
        out2d = build(1)(*args)
    except Exception:
        # Fallback: default double-buffering for the resident operands.
        out2d = build(None)(*args)

    out2d = out2d[:M, :H]
    return out2d.reshape(B, S, H)


def feed_forward_ref(x, w1, b1, w2, b2):
    """Pure-JAX f32 reference for correctness checking."""
    h = jnp.einsum("bsh,hi->bsi", x, w1) + b1
    a = h * 0.5 * (1.0 + lax.erf(h / jnp.sqrt(2.0)))
    return jnp.einsum("bsi,ih->bsh", a, w2) + b2


if __name__ == "__main__":
    # Small config consistent with the module:
    #   hidden_size=32, intermediate_size=128, batch=2, seq=8
    B, S, H, I = 2, 8, 32, 128

    key = jax.random.PRNGKey(0)
    k_x, k_w1, k_b1, k_w2, k_b2 = jax.random.split(key, 5)

    x = jax.random.normal(k_x, (B, S, H), dtype=jnp.float32)
    # Deterministic "nn.Linear"-style init (uniform in +/- 1/sqrt(fan_in)).
    w1 = jax.random.uniform(k_w1, (H, I), jnp.float32,
                            minval=-1.0 / math.sqrt(H), maxval=1.0 / math.sqrt(H))
    b1 = jax.random.uniform(k_b1, (I,), jnp.float32,
                            minval=-1.0 / math.sqrt(H), maxval=1.0 / math.sqrt(H))
    w2 = jax.random.uniform(k_w2, (I, H), jnp.float32,
                            minval=-1.0 / math.sqrt(I), maxval=1.0 / math.sqrt(I))
    b2 = jax.random.uniform(k_b2, (H,), jnp.float32,
                            minval=-1.0 / math.sqrt(I), maxval=1.0 / math.sqrt(I))

    # One-time weight prep (bf16 at rest + lane padding of the output dim).
    params = prepare_ffn_params(w1, b1, w2, b2)

    out = feed_forward(x, params)
    out = jax.block_until_ready(out)

    ref = feed_forward_ref(x, w1, b1, w2, b2)
    assert out.shape == (B, S, H)
    # bf16 matmul operands (f32 accumulation) -> loosened tolerance vs f32 ref.
    # TODO(synk): gate compute_dtype=f32 for parity-sensitive (1e-5) use.
    assert jnp.allclose(out, ref, atol=2e-2, rtol=2e-2), "mismatch vs reference"

    print("KERNEL_OK")
</pallas_src>

<mosaic_0001>
module attributes {stable_mosaic.version = 11 : i64} {
  func.func @_ffn_kernel(%arg0: i32, %arg1: memref<8x32xf32, #tpu.memory_space<vmem>>, %arg2: memref<32x128xbf16, #tpu.memory_space<vmem>>, %arg3: memref<1x128xf32, #tpu.memory_space<vmem>>, %arg4: memref<128x128xbf16, #tpu.memory_space<vmem>>, %arg5: memref<1x128xf32, #tpu.memory_space<vmem>>, %arg6: memref<8x128xf32, #tpu.memory_space<vmem>>) attributes {dimension_semantics = [#tpu.dimension_semantics<parallel>], iteration_bounds = array<i64: 2>, scalar_prefetch = 0 : i64, scratch_operands = 0 : i64, tpu.core_type = #tpu.core_type<tc>, window_params = [{transform_indices = @transform_0, window_bounds = array<i64: 8, 32>}, {pipeline_mode = #tpu.pipeline_mode<synchronous>, transform_indices = @transform_1, window_bounds = array<i64: 32, 128>}, {pipeline_mode = #tpu.pipeline_mode<synchronous>, transform_indices = @transform_2, window_bounds = array<i64: 1, 128>}, {pipeline_mode = #tpu.pipeline_mode<synchronous>, transform_indices = @transform_3, window_bounds = array<i64: 128, 128>}, {pipeline_mode = #tpu.pipeline_mode<synchronous>, transform_indices = @transform_4, window_bounds = array<i64: 1, 128>}, {transform_indices = @transform_5, window_bounds = array<i64: 8, 128>}]} {
    %c0 = arith.constant 0 : index
    %c0_0 = arith.constant 0 : index
    %0 = vector.load %arg1[%c0, %c0_0] : memref<8x32xf32, #tpu.memory_space<vmem>>, vector<8x32xf32>
    %1 = arith.truncf %0 : vector<8x32xf32> to vector<8x32xbf16>
    %c0_1 = arith.constant 0 : index
    %c0_2 = arith.constant 0 : index
    %2 = vector.load %arg2[%c0_1, %c0_2] : memref<32x128xbf16, #tpu.memory_space<vmem>>, vector<32x128xbf16>
    %cst = arith.constant dense<0.000000e+00> : vector<8x128xf32>
    %3 = tpu.matmul %1, %2, %cst {dimension_numbers = #tpu.dot_dimension_numbers<[1], [0], [0], [1], [0, 0, 1, 1], [], []>} : vector<8x32xbf16>, vector<32x128xbf16>, vector<8x128xf32> -> vector<8x128xf32>
    %c0_3 = arith.constant 0 : index
    %c0_4 = arith.constant 0 : index
    %4 = vector.load %arg3[%c0_3, %c0_4] : memref<1x128xf32, #tpu.memory_space<vmem>>, vector<1x128xf32>
    %5 = vector.broadcast %4 : vector<1x128xf32> to vector<8x128xf32>
    %6 = arith.addf %3, %5 : vector<8x128xf32>
    %cst_5 = arith.constant 0.707106769 : f32
    %7 = vector.broadcast %cst_5 : f32 to vector<8x128xf32>
    %8 = arith.mulf %6, %7 : vector<8x128xf32>
    %9 = math.erf %8 : vector<8x128xf32>
    %cst_6 = arith.constant 1.000000e+00 : f32
    %10 = vector.broadcast %cst_6 : f32 to vector<8x128xf32>
    %11 = arith.addf %10, %9 : vector<8x128xf32>
    %cst_7 = arith.constant 5.000000e-01 : f32
    %12 = vector.broadcast %cst_7 : f32 to vector<8x128xf32>
    %13 = arith.mulf %12, %11 : vector<8x128xf32>
    %14 = arith.mulf %6, %13 : vector<8x128xf32>
    %15 = arith.truncf %14 : vector<8x128xf32> to vector<8x128xbf16>
    %c0_8 = arith.constant 0 : index
    %c0_9 = arith.constant 0 : index
    %16 = vector.load %arg4[%c0_8, %c0_9] : memref<128x128xbf16, #tpu.memory_space<vmem>>, vector<128x128xbf16>
    %cst_10 = arith.constant dense<0.000000e+00> : vector<8x128xf32>
    %17 = tpu.matmul %15, %16, %cst_10 {dimension_numbers = #tpu.dot_dimension_numbers<[1], [0], [0], [1], [0, 0, 1, 1], [], []>} : vector<8x128xbf16>, vector<128x128xbf16>, vector<8x128xf32> -> vector<8x128xf32>
    %c0_11 = arith.constant 0 : index
    %c0_12 = arith.constant 0 : index
    %18 = vector.load %arg5[%c0_11, %c0_12] : memref<1x128xf32, #tpu.memory_space<vmem>>, vector<1x128xf32>
    %19 = vector.broadcast %18 : vector<1x128xf32> to vector<8x128xf32>
    %20 = arith.addf %17, %19 : vector<8x128xf32>
    %c0_13 = arith.constant 0 : index
    %c0_14 = arith.constant 0 : index
    %21 = vector.load %arg6[%c0_13, %c0_14] : memref<8x128xf32, #tpu.memory_space<vmem>>, vector<8x128xf32>
    tpu.vector_store %arg6[%c0_13, %c0_14], %20 {strides = array<i32>} : memref<8x128xf32, #tpu.memory_space<vmem>>, vector<8x128xf32>,
    return
  }
  func.func @transform_0(%arg0: i32) -> (i32, i32) {
    %c0_i32 = arith.constant 0 : i32
    %c0_i32_0 = arith.constant 0 : i32
    return %arg0, %c0_i32 : i32, i32
  }
  func.func @transform_1(%arg0: i32) -> (i32, i32) {
    %c0_i32 = arith.constant 0 : i32
    %c0_i32_0 = arith.constant 0 : i32
    %c0_i32_1 = arith.constant 0 : i32
    return %c0_i32, %c0_i32_0 : i32, i32
  }
  func.func @transform_2(%arg0: i32) -> (i32, i32) {
    %c0_i32 = arith.constant 0 : i32
    %c0_i32_0 = arith.constant 0 : i32
    %c0_i32_1 = arith.constant 0 : i32
    return %c0_i32, %c0_i32_0 : i32, i32
  }
  func.func @transform_3(%arg0: i32) -> (i32, i32) {
    %c0_i32 = arith.constant 0 : i32
    %c0_i32_0 = arith.constant 0 : i32
    %c0_i32_1 = arith.constant 0 : i32
    return %c0_i32, %c0_i32_0 : i32, i32
  }
  func.func @transform_4(%arg0: i32) -> (i32, i32) {
    %c0_i32 = arith.constant 0 : i32
    %c0_i32_0 = arith.constant 0 : i32
    %c0_i32_1 = arith.constant 0 : i32
    return %c0_i32, %c0_i32_0 : i32, i32
  }
  func.func @transform_5(%arg0: i32) -> (i32, i32) {
    %c0_i32 = arith.constant 0 : i32
    %c0_i32_0 = arith.constant 0 : i32
    return %arg0, %c0_i32 : i32, i32
  }
}

module attributes {stable_mosaic.version = 11 : i64} {
  func.func @_ffn_kernel(%arg0: i32, %arg1: memref<8x32xf32, #tpu.memory_space<vmem>>, %arg2: memref<32x128xbf16, #tpu.memory_space<vmem>>, %arg3: memref<1x128xf32, #tpu.memory_space<vmem>>, %arg4: memref<128x128xbf16, #tpu.memory_space<vmem>>, %arg5: memref<1x128xf32, #tpu.memory_space<vmem>>, %arg6: memref<8x128xf32, #tpu.memory_space<vmem>>) attributes {dimension_semantics = [#tpu.dimension_semantics<parallel>], iteration_bounds = array<i64: 2>, scalar_prefetch = 0 : i64, scratch_operands = 0 : i64, tpu.core_type = #tpu.core_type<tc>, window_params = [{transform_indices = @transform_0, window_bounds = array<i64: 8, 32>}, {pipeline_mode = #tpu.pipeline_mode<synchronous>, transform_indices = @transform_1, window_bounds = array<i64: 32, 128>}, {pipeline_mode = #tpu.pipeline_mode<synchronous>, transform_indices = @transform_2, window_bounds = array<i64: 1, 128>}, {pipeline_mode = #tpu.pipeline_mode<synchronous>, transform_indices = @transform_3, window_bounds = array<i64: 128, 128>}, {pipeline_mode = #tpu.pipeline_mode<synchronous>, transform_indices = @transform_4, window_bounds = array<i64: 1, 128>}, {transform_indices = @transform_5, window_bounds = array<i64: 8, 128>}]} {
    %c0 = arith.constant 0 : index
    %c0_0 = arith.constant 0 : index
    %0 = vector.load %arg1[%c0, %c0_0] : memref<8x32xf32, #tpu.memory_space<vmem>>, vector<8x32xf32>
    %1 = arith.truncf %0 : vector<8x32xf32> to vector<8x32xbf16>
    %c0_1 = arith.constant 0 : index
    %c0_2 = arith.constant 0 : index
    %2 = vector.load %arg2[%c0_1, %c0_2] : memref<32x128xbf16, #tpu.memory_space<vmem>>, vector<32x128xbf16>
    %cst = arith.constant dense<0.000000e+00> : vector<8x128xf32>
    %3 = tpu.matmul %1, %2, %cst {dimension_numbers = #tpu.dot_dimension_numbers<[1], [0], [0], [1], [0, 0, 1, 1], [], []>} : vector<8x32xbf16>, vector<32x128xbf16>, vector<8x128xf32> -> vector<8x128xf32>
    %c0_3 = arith.constant 0 : index
    %c0_4 = arith.constant 0 : index
    %4 = vector.load %arg3[%c0_3, %c0_4] : memref<1x128xf32, #tpu.memory_space<vmem>>, vector<1x128xf32>
    %5 = vector.broadcast %4 : vector<1x128xf32> to vector<8x128xf32>
    %6 = arith.addf %3, %5 : vector<8x128xf32>
    %cst_5 = arith.constant 0.707106769 : f32
    %7 = vector.broadcast %cst_5 : f32 to vector<8x128xf32>
    %8 = arith.mulf %6, %7 : vector<8x128xf32>
    %9 = math.erf %8 : vector<8x128xf32>
    %cst_6 = arith.constant 1.000000e+00 : f32
    %10 = vector.broadcast %cst_6 : f32 to vector<8x128xf32>
    %11 = arith.addf %10, %9 : vector<8x128xf32>
    %cst_7 = arith.constant 5.000000e-01 : f32
    %12 = vector.broadcast %cst_7 : f32 to vector<8x128xf32>
    %13 = arith.mulf %12, %11 : vector<8x128xf32>
    %14 = arith.mulf %6, %13 : vector<8x128xf32>
    %15 = arith.truncf %14 : vector<8x128xf32> to vector<8x128xbf16>
    %c0_8 = arith.constant 0 : index
    %c0_9 = arith.constant 0 : index
    %16 = vector.load %arg4[%c0_8, %c0_9] : memref<128x128xbf16, #tpu.memory_space<vmem>>, vector<128x128xbf16>
    %cst_10 = arith.constant dense<0.000000e+00> : vector<8x128xf32>
    %17 = tpu.matmul %15, %16, %cst_10 {dimension_numbers = #tpu.dot_dimension_numbers<[1], [0], [0], [1], [0, 0, 1, 1], [], []>} : vector<8x128xbf16>, vector<128x128xbf16>, vector<8x128xf32> -> vector<8x128xf32>
    %c0_11 = arith.constant 0 : index
    %c0_12 = arith.constant 0 : index
    %18 = vector.load %arg5[%c0_11, %c0_12] : memref<1x128xf32, #tpu.memory_space<vmem>>, vector<1x128xf32>
    %19 = vector.broadcast %18 : vector<1x128xf32> to vector<8x128xf32>
    %20 = arith.addf %17, %19 : vector<8x128xf32>
    %c0_13 = arith.constant 0 : index
    %c0_14 = arith.constant 0 : index
    %21 = vector.load %arg6[%c0_13, %c0_14] : memref<8x128xf32, #tpu.memory_space<vmem>>, vector<8x128xf32>
    tpu.vector_store %arg6[%c0_13, %c0_14], %20 {strides = array<i32>} : memref<8x128xf32, #tpu.memory_space<vmem>>, vector<8x128xf32>,
    return
  }
  func.func @transform_0(%arg0: i32) -> (i32, i32) {
    %c0_i32 = arith.constant 0 : i32
    %c0_i32_0 = arith.constant 0 : i32
    return %arg0, %c0_i32 : i32, i32
  }
  func.func @transform_1(%arg0: i32) -> (i32, i32) {
    %c0_i32 = arith.constant 0 : i32
    %c0_i32_0 = arith.constant 0 : i32
    %c0_i32_1 = arith.constant 0 : i32
    return %c0_i32, %c0_i32_0 : i32, i32
  }
  func.func @transform_2(%arg0: i32) -> (i32, i32) {
    %c0_i32 = arith.constant 0 : i32
    %c0_i32_0 = arith.constant 0 : i32
    %c0_i32_1 = arith.constant 0 : i32
    return %c0_i32, %c0_i32_0 : i32, i32
  }
  func.func @transform_3(%arg0: i32) -> (i32, i32) {
    %c0_i32 = arith.constant 0 : i32
    %c0_i32_0 = arith.constant 0 : i32
    %c0_i32_1 = arith.constant 0 : i32
    return %c0_i32, %c0_i32_0 : i32, i32
  }
  func.func @transform_4(%arg0: i32) -> (i32, i32) {
    %c0_i32 = arith.constant 0 : i32
    %c0_i32_0 = arith.constant 0 : i32
    %c0_i32_1 = arith.constant 0 : i32
    return %c0_i32, %c0_i32_0 : i32, i32
  }
  func.func @transform_5(%arg0: i32) -> (i32, i32) {
    %c0_i32 = arith.constant 0 : i32
    %c0_i32_0 = arith.constant 0 : i32
    return %arg0, %c0_i32 : i32, i32
  }
}

</mosaic_0001>

<llo_original>
// kernel: tpu_custom_call.1
$region0: #{tpu_custom_call.1}
  #allocation0 [shape = 'u32[]', space=smem, size = 0x4, offset = 0x4, fixed_abs, tag = 'smem constant byte address 0x4 - core index']
  #allocation1 [shape = 'u32[144,128]{1,0:T(1,128)}', space=vmem, size = 0x12000, scoped, tag = 'internal scratch']
  %s0 = inlined_call_operand.hbm [shape: f32[16,32], index: 0, kind: input, shape index: {}]
  %s1 = inlined_call_operand.hbm [shape: bf16[32,128], index: 1, kind: input, shape index: {}]
  %s2 = inlined_call_operand.vmem [shape: f32[1,128], index: 2, kind: input, shape index: {}]
  %s3 = inlined_call_operand.hbm [shape: bf16[128,128], index: 3, kind: input, shape index: {}]
  %s4 = inlined_call_operand.vmem [shape: f32[1,128], index: 4, kind: input, shape index: {}]
  %s5 = inlined_call_operand.hbm [shape: f32[16,128], index: 5, kind: output, shape index: {}]
  %s6 = sld [smem:[#allocation0]]
  $region65: #{tpu_custom_call.1} parent=0
    _
  %s8 = ssub.s32 1, %s6
  %s9 = scalar_select 0, %s8, %s6
  $region1: #{tpu_custom_call.1} parent=0
    #allocation2 [shape = 'u8[8192]{0}', space=vmem, size = 0x2000, scoped, tag = 'input window, operand 0']
    #allocation3 [shape = 's32[2]{0}', space=sflag, size = 0x8, scoped, tag = 'scoped memory for tpu_custom_call.1']
    #allocation4 [shape = 's32[2]{0}', space=sflag, size = 0x8, scoped, tag = 'scoped memory for tpu_custom_call.1']
    #allocation5 [shape = 'u8[8192]{0}', space=vmem, size = 0x2000, scoped, tag = 'input window, operand 1, single buffered']
    #allocation6 [shape = 's32[1]{0}', space=sflag, size = 0x4, scoped, tag = 'scoped memory for tpu_custom_call.1']
    #allocation7 [shape = 'u8[32768]{0}', space=vmem, size = 0x8000, scoped, tag = 'input window, operand 3, single buffered']
    #allocation8 [shape = 'u8[8192]{0}', space=vmem, size = 0x2000, scoped, tag = 'output window, operand 0']
    %10 = vsyncpa [#allocation3], 0
    %s11 = scalar_lea.sflag [#allocation3], 1
    %12 = vsyncpa %s11, 0
    %13 = vsyncpa [#allocation6], 0
    %14 = vsyncpa [#allocation4], 0
    %s15 = scalar_lea.sflag [#allocation4], 1
    %16 = vsyncpa %s15, 0
    loop: start=0, step=1, limit=4
    $region2: #{tpu_custom_call.1} parent=1 // loop_pre_header
      _
    $region3: #{tpu_custom_call.1} parent=1 // loop_header
      %s18 = sphi 0, %s22
      %p19 = scmp.ge.s32.totalorder %s18, 4
      %s28 = sphi 0, %s30
      %s31 = sphi 0, %s28
      %s32 = sphi 0, %s31
      %s48 = sphi 0, %s32
      %s52 = sphi 0, %s52
      %s54 = sphi 0, %s52
      %s55 = sphi 0, %s54
      %s69 = sphi 0, %s55
      %s73 = sphi 0, %s73
      %s75 = sphi 0, %s73
      %s76 = sphi 0, %s75
      %s90 = sphi 0, %s76
      %s94 = sphi 0, %s94
      %s96 = sphi 0, %s94
      %s97 = sphi 0, %s96
      %s111 = sphi 0, %s97
      %s115 = sphi 0, %s115
      %s117 = sphi 0, %s115
      %s118 = sphi 0, %s117
      %s132 = sphi 0, %s118
      %s138 = sphi 0, %s140
      %s141 = sphi 0, %s138
      %s142 = sphi 0, %s141
      %s158 = sphi 0, %s142
    $region4: #{tpu_custom_call.1} parent=1 // loop_header_branch
      %21 = sbr.rel (%p19) target = $region8
    $region5: #{tpu_custom_call.1} parent=1 // loop_body
      %s23 = ssub.s32 %s18, 1
      %s24 = ssub.s32 %s18, 2
      %s25 = sadd.s32 %s18, 1
      %s26 = ssub.s32 %s18, %s25
      %p27 = scmp.eq.s32.totalorder %s26, 0
      %s29 = sadd.s32 %s28, 1
      %s30 = scalar_select %p27, %s28, %s29
      %p33 = pneg %p27
      %p34 = scmp.eq.s32.totalorder %s18, 1
      %p35 = por %p33, %p34
      %p36 = scmp.ne.s32.totalorder %s28, %s31
      %p37 = scmp.eq.s32.totalorder %s18, 0
      %p38 = por %p36, %p37
      %p39 = scmp.ne.s32.totalorder %s28, %s31
      %p40 = scmp.eq.s32.totalorder %s23, 1
      %p41 = por %p39, %p40
      %p42 = scmp.ne.s32.totalorder %s31, %s32
      %p43 = scmp.eq.s32.totalorder %s23, 0
      %p44 = por %p42, %p43
      %p45 = scmp.ne.s32.totalorder %s31, %s32
      %p46 = scmp.eq.s32.totalorder %s24, 1
      %p47 = por %p45, %p46
      %p49 = scmp.ne.s32.totalorder %s32, %s48
      %p50 = scmp.eq.s32.totalorder %s24, 0
      %p51 = por %p49, %p50
      %s53 = sadd.s32 %s52, 1
      %p56 = scmp.eq.s32.totalorder %s18, 1
      %p57 = scmp.ne.s32.totalorder %s52, %s54
      %p58 = scmp.eq.s32.totalorder %s18, 0
      %p59 = por %p57, %p58
      %p60 = scmp.ne.s32.totalorder %s52, %s54
      %p61 = scmp.eq.s32.totalorder %s23, 1
      %p62 = por %p60, %p61
      %p63 = scmp.ne.s32.totalorder %s54, %s55
      %p64 = scmp.eq.s32.totalorder %s23, 0
      %p65 = por %p63, %p64
      %p66 = scmp.ne.s32.totalorder %s54, %s55
      %p67 = scmp.eq.s32.totalorder %s24, 1
      %p68 = por %p66, %p67
      %p70 = scmp.ne.s32.totalorder %s55, %s69
      %p71 = scmp.eq.s32.totalorder %s24, 0
      %p72 = por %p70, %p71
      %s74 = sadd.s32 %s73, 1
      %p77 = scmp.eq.s32.totalorder %s18, 1
      %p78 = scmp.ne.s32.totalorder %s73, %s75
      %p79 = scmp.eq.s32.totalorder %s18, 0
      %p80 = por %p78, %p79
      %p81 = scmp.ne.s32.totalorder %s73, %s75
      %p82 = scmp.eq.s32.totalorder %s23, 1
      %p83 = por %p81, %p82
      %p84 = scmp.ne.s32.totalorder %s75, %s76
      %p85 = scmp.eq.s32.totalorder %s23, 0
      %p86 = por %p84, %p85
      %p87 = scmp.ne.s32.totalorder %s75, %s76
      %p88 = scmp.eq.s32.totalorder %s24, 1
      %p89 = por %p87, %p88
      %p91 = scmp.ne.s32.totalorder %s76, %s90
      %p92 = scmp.eq.s32.totalorder %s24, 0
      %p93 = por %p91, %p92
      %s95 = sadd.s32 %s94, 1
      %p98 = scmp.eq.s32.totalorder %s18, 1
      %p99 = scmp.ne.s32.totalorder %s94, %s96
      %p100 = scmp.eq.s32.totalorder %s18, 0
      %p101 = por %p99, %p100
      %p102 = scmp.ne.s32.totalorder %s94, %s96
      %p103 = scmp.eq.s32.totalorder %s23, 1
      %p104 = por %p102, %p103
      %p105 = scmp.ne.s32.totalorder %s96, %s97
      %p106 = scmp.eq.s32.totalorder %s23, 0
      %p107 = por %p105, %p106
      %p108 = scmp.ne.s32.totalorder %s96, %s97
      %p109 = scmp.eq.s32.totalorder %s24, 1
      %p110 = por %p108, %p109
      %p112 = scmp.ne.s32.totalorder %s97, %s111
      %p113 = scmp.eq.s32.totalorder %s24, 0
      %p114 = por %p112, %p113
      %s116 = sadd.s32 %s115, 1
      %p119 = scmp.eq.s32.totalorder %s18, 1
      %p120 = scmp.ne.s32.totalorder %s115, %s117
      %p121 = scmp.eq.s32.totalorder %s18, 0
      %p122 = por %p120, %p121
      %p123 = scmp.ne.s32.totalorder %s115, %s117
      %p124 = scmp.eq.s32.totalorder %s23, 1
      %p125 = por %p123, %p124
      %p126 = scmp.ne.s32.totalorder %s117, %s118
      %p127 = scmp.eq.s32.totalorder %s23, 0
      %p128 = por %p126, %p127
      %p129 = scmp.ne.s32.totalorder %s117, %s118
      %p130 = scmp.eq.s32.totalorder %s24, 1
      %p131 = por %p129, %p130
      %p133 = scmp.ne.s32.totalorder %s118, %s132
      %p134 = scmp.eq.s32.totalorder %s24, 0
      %p135 = por %p133, %p134
      %s136 = ssub.s32 %s18, %s25
      %p137 = scmp.eq.s32.totalorder %s136, 0
      %s139 = sadd.s32 %s138, 1
      %s140 = scalar_select %p137, %s138, %s139
      %p143 = pneg %p137
      %p144 = scmp.eq.s32.totalorder %s18, 1
      %p145 = por %p143, %p144
      %p146 = scmp.ne.s32.totalorder %s138, %s141
      %p147 = scmp.eq.s32.totalorder %s18, 0
      %p148 = por %p146, %p147
      %p149 = scmp.ne.s32.totalorder %s138, %s141
      %p150 = scmp.eq.s32.totalorder %s23, 1
      %p151 = por %p149, %p150
      %p152 = scmp.ne.s32.totalorder %s141, %s142
      %p153 = scmp.eq.s32.totalorder %s23, 0
      %p154 = por %p152, %p153
      %p155 = scmp.ne.s32.totalorder %s141, %s142
      %p156 = scmp.eq.s32.totalorder %s24, 1
      %p157 = por %p155, %p156
      %p159 = scmp.ne.s32.totalorder %s142, %s158
      %p160 = scmp.eq.s32.totalorder %s24, 0
      %p161 = por %p159, %p160
      %p162 = scmp.le.s32.totalorder 1, %s18
      %p163 = scmp.lt.s32.totalorder %s18, 3
      %p164 = pnand %p162, %p163
      %p165 = pneg %p164
      // Predicated region
      $region9: #{tpu_custom_call.1} parent=5 // pred_check
        _
      $region10: #{tpu_custom_call.1} parent=5 // pred_check_branch
        %167 = sbr.rel (%p164) target = $region12
      $region11: #{tpu_custom_call.1} parent=5 // pred_region
        %s168 = ssub.s32 %s18, 1
        // Predicated region
        $region13: #{tpu_custom_call.1} parent=11 // pred_check
          %p169 = pneg %p65
        $region14: #{tpu_custom_call.1} parent=11 // pred_check_branch
          %171 = sbr.rel (%p169) target = $region16
        $region15: #{tpu_custom_call.1} parent=11 // pred_region
          %s173 = ssub.s32 256, 256
          %174 = vsyncadd [#allocation6], %s173
          %s175 = sshll.u32 [#allocation5], 4
          %s176 = int_to_ptr.vmem [resolvable:$true] %s175
          %181 = dma.hbm_to_vmem [thread:$0]  %s1, 256, %s176, [#allocation6], 64, 64, 4
        $region16: #{tpu_custom_call.1} parent=11 // pred_fallthru
          _
        // Predicated region
        $region17: #{tpu_custom_call.1} parent=11 // pred_check
          %p182 = pneg %p86
        $region18: #{tpu_custom_call.1} parent=11 // pred_check_branch
          %184 = sbr.rel (%p182) target = $region20
        $region19: #{tpu_custom_call.1} parent=11 // pred_region
          _
        $region20: #{tpu_custom_call.1} parent=11 // pred_fallthru
          _
        // Predicated region
        $region21: #{tpu_custom_call.1} parent=11 // pred_check
          %p185 = pneg %p107
        $region22: #{tpu_custom_call.1} parent=11 // pred_check_branch
          %187 = sbr.rel (%p185) target = $region24
        $region23: #{tpu_custom_call.1} parent=11 // pred_region
          %s189 = ssub.s32 1024, 1024
          %190 = vsyncadd [#allocation6], %s189
          %s191 = sshll.u32 [#allocation7], 4
          %s192 = int_to_ptr.vmem [resolvable:$true] %s191
          %197 = dma.hbm_to_vmem [thread:$0]  %s3, 1024, %s192, [#allocation6], 64, 64, 4
        $region24: #{tpu_custom_call.1} parent=11 // pred_fallthru
          _
        // Predicated region
        $region25: #{tpu_custom_call.1} parent=11 // pred_check
          %p198 = pneg %p128
        $region26: #{tpu_custom_call.1} parent=11 // pred_check_branch
          %200 = sbr.rel (%p198) target = $region28
        $region27: #{tpu_custom_call.1} parent=11 // pred_region
          _
        $region28: #{tpu_custom_call.1} parent=11 // pred_fallthru
          _
      $region12: #{tpu_custom_call.1} parent=5 // pred_fallthru
        _
      %p201 = scmp.lt.s32.totalorder %s18, 2
      // Predicated region
      $region29: #{tpu_custom_call.1} parent=5 // pred_check
        %p202 = pneg %p201
      $region30: #{tpu_custom_call.1} parent=5 // pred_check_branch
        %204 = sbr.rel (%p202) target = $region32
      $region31: #{tpu_custom_call.1} parent=5 // pred_region
        // Predicated region
        $region33: #{tpu_custom_call.1} parent=31 // pred_check
          %p205 = pneg %p38
        $region34: #{tpu_custom_call.1} parent=31 // pred_check_branch
          %207 = sbr.rel (%p205) target = $region36
        $region35: #{tpu_custom_call.1} parent=31 // pred_region
          %s208 = sand.u32 %s28, 1
          %s209 = scalar_lea.sflag [#allocation3], %s208
          %s210 = sand.u32 %s28, 1
          %s211 = smul.addr %s210, 8
          %s212 = scalar_lea.vmem [#allocation2], %s211
          %s214 = ssub.s32 128, 128
          %215 = vsyncadd %s209, %s214
          %s216 = smul.addr %s18, 128
          %s217 = scalar_lea.hbm %s0, %s216
          %s219 = sshll.u32 %s212, 4
          %s220 = int_to_ptr.vmem [resolvable:$true] %s219
          %222 = dma.hbm_to_vmem [thread:$0]  %s217, 128, %s220, %s209
        $region36: #{tpu_custom_call.1} parent=31 // pred_fallthru
          _
      $region32: #{tpu_custom_call.1} parent=5 // pred_fallthru
        _
      %p223 = scmp.le.s32.totalorder 1, %s18
      %p224 = scmp.lt.s32.totalorder %s18, 3
      %p225 = pnand %p223, %p224
      %p226 = pneg %p225
      // Predicated region
      $region37: #{tpu_custom_call.1} parent=5 // pred_check
        _
      $region38: #{tpu_custom_call.1} parent=5 // pred_check_branch
        %228 = sbr.rel (%p225) target = $region40
      $region39: #{tpu_custom_call.1} parent=5 // pred_region
        %s229 = ssub.s32 %s18, 1
        %s230 = sand.u32 %s31, 1
        %s231 = scalar_lea.sflag [#allocation3], %s230
        %s232 = sand.u32 %s31, 1
        %s233 = smul.addr %s232, 8
        %s234 = scalar_lea.vmem [#allocation2], %s233
        // Predicated region
        $region41: #{tpu_custom_call.1} parent=39 // pred_check
          %p235 = pneg %p44
        $region42: #{tpu_custom_call.1} parent=39 // pred_check_branch
          %237 = sbr.rel (%p235) target = $region44
        $region43: #{tpu_custom_call.1} parent=39 // pred_region
          %238 = dma.done %s231, 128
        $region44: #{tpu_custom_call.1} parent=39 // pred_fallthru
          _
        // Predicated region
        $region45: #{tpu_custom_call.1} parent=39 // pred_check
          %p239 = pneg %p65
        $region46: #{tpu_custom_call.1} parent=39 // pred_check_branch
          %241 = sbr.rel (%p239) target = $region48
        $region47: #{tpu_custom_call.1} parent=39 // pred_region
          %242 = dma.done [#allocation6], 256
        $region48: #{tpu_custom_call.1} parent=39 // pred_fallthru
          _
        // Predicated region
        $region49: #{tpu_custom_call.1} parent=39 // pred_check
          %p243 = pneg %p107
        $region50: #{tpu_custom_call.1} parent=39 // pred_check_branch
          %245 = sbr.rel (%p243) target = $region52
        $region51: #{tpu_custom_call.1} parent=39 // pred_region
          %246 = dma.done [#allocation6], 1024
        $region52: #{tpu_custom_call.1} parent=39 // pred_fallthru
          _
        %s247 = sand.u32 %s31, 1
        %s248 = scalar_lea.sflag [#allocation3], %s247
        %s249 = sand.u32 %s31, 1
        %s250 = smul.addr %s249, 8
        %s251 = scalar_lea.vmem [#allocation2], %s250
        %p252 = pneg %p44
        %p253 = pneg %p41
        %p254 = pneg %p65
        %p255 = pneg %p62
        %p256 = pneg %p86
        %p257 = pneg %p83
        %p258 = pneg %p107
        %p259 = pneg %p104
        %p260 = pneg %p128
        %p261 = pneg %p125
        %p262 = pneg %p154
        %p263 = pneg %p151
        %s264 = sand.u32 %s141, 1
        %s265 = scalar_lea.sflag [#allocation4], %s264
        %s266 = sand.u32 %s141, 1
        %s267 = smul.addr %s266, 8
        %s268 = scalar_lea.vmem [#allocation8], %s267
        %v270 = vld [vmem:[%s234] sm:$0xff]
        %v271 = vpack.c.bf16 %v270, %v270
        %v272 = vld [vmem:[#allocation5] sm:$0xf]
        %v273 = vld [vmem:[#allocation5 + $0x4] sm:$0xf]
        %v274 = vld [vmem:[#allocation5 + $0x8] sm:$0xf]
        %v275 = vld [vmem:[#allocation5 + $0xc] sm:$0xf]
        %v276 = vld [vmem:[%s2] sm:$0x1]
        %v278 = vlaneseq
        %v279 = vshrl.u32 %v278, 7
        %v280 = vsub.s32 0, %v279
        %v281 = vrot.slane %v276, %v280
        %v287 = vunpack.c.l.b16 %v272
        %v288 = vunpack.c.l.b16 %v273
        %v289 = vunpack.c.l.b16 %v274
        %v290 = vunpack.c.l.b16 %v275
        %v291 = vpack.c.b16 %v288, %v287
        %v292 = vpack.c.b16 %v290, %v289
        %vm295 = vcmask 261120
        %v297 = vsel %vm295, %v271, 0
        %299 = vmatprep.subr.bf16.mxu0 0
        %300 = vmatpush1.bf16.msra.mxu0 %v291
        %301 = vmatprep.subr.bf16.mxu0 0
        %302 = vmatpush1.bf16.msra.mxu0 %v292
        %303 = vmatprep.subr.bf16.mxu0 0
        %304 = vmatpush1.bf16.msra.mxu0 0
        %305 = vmatprep.subr.bf16.mxu0 0
        %306 = vmatpush1.bf16.msra.mxu0 0
        %307 = vmatprep.subr.bf16.mxu0 0
        %308 = vmatpush1.bf16.msra.mxu0 0
        %309 = vmatprep.subr.bf16.mxu0 0
        %310 = vmatpush1.bf16.msra.mxu0 0
        %311 = vmatprep.subr.bf16.mxu0 0
        %312 = vmatpush1.bf16.msra.mxu0 0
        %313 = vmatprep.subr.bf16.mxu0 0
        %314 = vmatpush1.bf16.msra.mxu0 0
        %315 = vmatprep.subr.bf16.mxu0 0
        %316 = vmatpush1.bf16.msra.mxu0 0
        %317 = vmatprep.subr.bf16.mxu0 0
        %318 = vmatpush1.bf16.msra.mxu0 0
        %319 = vmatprep.subr.bf16.mxu0 0
        %320 = vmatpush1.bf16.msra.mxu0 0
        %321 = vmatprep.subr.bf16.mxu0 0
        %322 = vmatpush1.bf16.msra.mxu0 0
        %323 = vmatprep.subr.bf16.mxu0 0
        %324 = vmatpush1.bf16.msra.mxu0 0
        %325 = vmatprep.subr.bf16.mxu0 0
        %326 = vmatpush1.bf16.msra.mxu0 0
        %327 = vmatprep.subr.bf16.mxu0 0
        %328 = vmatpush1.bf16.msra.mxu0 0
        %329 = vmatprep.subr.bf16.mxu0 0
        %330 = vmatpush1.bf16.msra.mxu0 0
        %331 = vmatprep.mubr.bf16.mxu0 0
        %332 = vmatmul.mubr.bf16.gmra.mrb[0].mxu0 %v297
        %v333 = vpop.f32.mrb[0].mxu0
        %v334 = vadd.f32 %v281, %v333
        %v335 = vpop.f32.mrb[0].mxu0
        %v336 = vpop.f32.mrb[0].mxu0
        %v337 = vpop.f32.mrb[0].mxu0
        %338 = vdwg.mxu0
        %v339 = vmul.f32 %v334, 0.70710677
        %v340 = verf.f32.pop %v339
        %v341 = vadd.f32 %v340, 1.0
        %v342 = vmul.f32 %v341, 0.5
        %v343 = vmul.f32 %v334, %v342
        %v344 = vpack.c.bf16 %v343, %v343
        %v345 = vld [vmem:[#allocation7] sm:$0xf]
        %v346 = vld [vmem:[#allocation7 + $0x4] sm:$0xf]
        %v347 = vld [vmem:[#allocation7 + $0x8] sm:$0xf]
        %v348 = vld [vmem:[#allocation7 + $0xc] sm:$0xf]
        %v349 = vld [vmem:[#allocation7 + $0x10] sm:$0xf]
        %v350 = vld [vmem:[#allocation7 + $0x14] sm:$0xf]
        %v351 = vld [vmem:[#allocation7 + $0x18] sm:$0xf]
        %v352 = vld [vmem:[#allocation7 + $0x1c] sm:$0xf]
        %v353 = vld [vmem:[#allocation7 + $0x20] sm:$0xf]
        %v354 = vld [vmem:[#allocation7 + $0x24] sm:$0xf]
        %v355 = vld [vmem:[#allocation7 + $0x28] sm:$0xf]
        %v356 = vld [vmem:[#allocation7 + $0x2c] sm:$0xf]
        %v357 = vld [vmem:[#allocation7 + $0x30] sm:$0xf]
        %v358 = vld [vmem:[#allocation7 + $0x34] sm:$0xf]
        %v359 = vld [vmem:[#allocation7 + $0x38] sm:$0xf]
        %v360 = vld [vmem:[#allocation7 + $0x3c] sm:$0xf]
        %v361 = vld [vmem:[%s4] sm:$0x1]
        %v363 = vlaneseq
        %v364 = vshrl.u32 %v363, 7
        %v365 = vsub.s32 0, %v364
        %v366 = vrot.slane %v361, %v365
        %v384 = vunpack.c.l.b16 %v345
        %v385 = vunpack.c.l.b16 %v346
        %v386 = vunpack.c.l.b16 %v347
        %v387 = vunpack.c.l.b16 %v348
        %v388 = vunpack.c.l.b16 %v349
        %v389 = vunpack.c.l.b16 %v350
        %v390 = vunpack.c.l.b16 %v351
        %v391 = vunpack.c.l.b16 %v352
        %v392 = vunpack.c.l.b16 %v353
        %v393 = vunpack.c.l.b16 %v354
        %v394 = vunpack.c.l.b16 %v355
        %v395 = vunpack.c.l.b16 %v356
        %v396 = vunpack.c.l.b16 %v357
        %v397 = vunpack.c.l.b16 %v358
        %v398 = vunpack.c.l.b16 %v359
        %v399 = vunpack.c.l.b16 %v360
        %v400 = vpack.c.b16 %v385, %v384
        %v401 = vpack.c.b16 %v387, %v386
        %v402 = vpack.c.b16 %v389, %v388
        %v403 = vpack.c.b16 %v391, %v390
        %v404 = vpack.c.b16 %v393, %v392
        %v405 = vpack.c.b16 %v395, %v394
        %v406 = vpack.c.b16 %v397, %v396
        %v407 = vpack.c.b16 %v399, %v398
        %416 = vmatprep.subr.bf16.mxu0 0
        %417 = vmatpush1.bf16.msra.mxu0 %v400
        %418 = vmatprep.subr.bf16.mxu0 0
        %419 = vmatpush1.bf16.msra.mxu0 %v401
        %420 = vmatprep.subr.bf16.mxu0 0
        %421 = vmatpush1.bf16.msra.mxu0 %v402
        %422 = vmatprep.subr.bf16.mxu0 0
        %423 = vmatpush1.bf16.msra.mxu0 %v403
        %424 = vmatprep.subr.bf16.mxu0 0
        %425 = vmatpush1.bf16.msra.mxu0 %v404
        %426 = vmatprep.subr.bf16.mxu0 0
        %427 = vmatpush1.bf16.msra.mxu0 %v405
        %428 = vmatprep.subr.bf16.mxu0 0
        %429 = vmatpush1.bf16.msra.mxu0 %v406
        %430 = vmatprep.subr.bf16.mxu0 0
        %431 = vmatpush1.bf16.msra.mxu0 %v407
        %432 = vmatprep.subr.bf16.mxu0 0
        %433 = vmatpush1.bf16.msra.mxu0 0
        %434 = vmatprep.subr.bf16.mxu0 0
        %435 = vmatpush1.bf16.msra.mxu0 0
        %436 = vmatprep.subr.bf16.mxu0 0
        %437 = vmatpush1.bf16.msra.mxu0 0
        %438 = vmatprep.subr.bf16.mxu0 0
        %439 = vmatpush1.bf16.msra.mxu0 0
        %440 = vmatprep.subr.bf16.mxu0 0
        %441 = vmatpush1.bf16.msra.mxu0 0
        %442 = vmatprep.subr.bf16.mxu0 0
        %443 = vmatpush1.bf16.msra.mxu0 0
        %444 = vmatprep.subr.bf16.mxu0 0
        %445 = vmatpush1.bf16.msra.mxu0 0
        %446 = vmatprep.subr.bf16.mxu0 0
        %447 = vmatpush1.bf16.msra.mxu0 0
        %448 = vmatprep.mubr.bf16.mxu0 0
        %449 = vmatmul.mubr.bf16.gmra.mrb[0].mxu0 %v344
        %v450 = vpop.f32.mrb[0].mxu0
        %v451 = vadd.f32 %v366, %v450
        %v452 = vpop.f32.mrb[0].mxu0
        %v453 = vpop.f32.mrb[0].mxu0
        %v454 = vpop.f32.mrb[0].mxu0
        %455 = vdwg.mxu0
        %456 = vst [vmem:[%s268] sm:$0xff] %v451
        %s457 = sand.u32 %s141, 1
        %s458 = scalar_lea.sflag [#allocation4], %s457
        %s459 = sand.u32 %s141, 1
        %s460 = smul.addr %s459, 8
        %s461 = scalar_lea.vmem [#allocation8], %s460
        // Predicated region
        $region53: #{tpu_custom_call.1} parent=39 // pred_check
          %p462 = pneg %p151
        $region54: #{tpu_custom_call.1} parent=39 // pred_check_branch
          %464 = sbr.rel (%p462) target = $region56
        $region55: #{tpu_custom_call.1} parent=39 // pred_region
          %s466 = ssub.s32 128, 128
          %467 = vsyncadd %s458, %s466
          %s468 = smul.addr %s23, 128
          %s469 = scalar_lea.hbm %s5, %s468
          %s471 = sshll.u32 %s461, 4
          %s472 = int_to_ptr.vmem [resolvable:$true] %s471
          %474 = dma.vmem_to_hbm [thread:$0]  %s472, 128, %s469, %s458
        $region56: #{tpu_custom_call.1} parent=39 // pred_fallthru
          _
      $region40: #{tpu_custom_call.1} parent=5 // pred_fallthru
        _
      %p475 = scmp.le.s32.totalorder 2, %s18
      // Predicated region
      $region57: #{tpu_custom_call.1} parent=5 // pred_check
        %p476 = pneg %p475
      $region58: #{tpu_custom_call.1} parent=5 // pred_check_branch
        %478 = sbr.rel (%p476) target = $region60
      $region59: #{tpu_custom_call.1} parent=5 // pred_region
        %s479 = ssub.s32 %s18, 2
        // Predicated region
        $region61: #{tpu_custom_call.1} parent=59 // pred_check
          %p480 = pneg %p157
        $region62: #{tpu_custom_call.1} parent=59 // pred_check_branch
          %482 = sbr.rel (%p480) target = $region64
        $region63: #{tpu_custom_call.1} parent=59 // pred_region
          %s483 = sand.u32 %s142, 1
          %s484 = scalar_lea.sflag [#allocation4], %s483
          %s485 = sand.u32 %s142, 1
          %s486 = smul.addr %s485, 8
          %s487 = scalar_lea.vmem [#allocation8], %s486
          %488 = dma.done %s484, 128
        $region64: #{tpu_custom_call.1} parent=59 // pred_fallthru
          _
      $region60: #{tpu_custom_call.1} parent=5 // pred_fallthru
        _
    $region6: #{tpu_custom_call.1} parent=1 // loop_footer
      %s22 = sadd.s32 1, %s18
    $region7: #{tpu_custom_call.1} parent=1 // loop_footer_branch
      %17 = sbr.rel target = $region3
    $region8: #{tpu_custom_call.1} parent=1 // loop_exit
      _
    %489 = vsyncpa [#allocation3], 1
    %s490 = scalar_lea.sflag [#allocation3], 1
    %491 = vsyncpa %s490, 1
    %492 = vsyncpa [#allocation6], 1
    %493 = vsyncpa [#allocation4], 1
    %s494 = scalar_lea.sflag [#allocation4], 1
    %495 = vsyncpa %s494, 1

// kernel: tpu_custom_call.1
$region0: #{tpu_custom_call.1}
  #allocation0 [shape = 'u32[]', space=smem, size = 0x4, offset = 0x4, fixed_abs, tag = 'smem constant byte address 0x4 - core index']
  #allocation1 [shape = 'u32[144,128]{1,0:T(1,128)}', space=vmem, size = 0x12000, scoped, tag = 'internal scratch']
  %s0 = inlined_call_operand.hbm [shape: f32[16,32], index: 0, kind: input, shape index: {}]
  %s1 = inlined_call_operand.hbm [shape: bf16[32,128], index: 1, kind: input, shape index: {}]
  %s2 = inlined_call_operand.vmem [shape: f32[1,128], index: 2, kind: input, shape index: {}]
  %s3 = inlined_call_operand.hbm [shape: bf16[128,128], index: 3, kind: input, shape index: {}]
  %s4 = inlined_call_operand.vmem [shape: f32[1,128], index: 4, kind: input, shape index: {}]
  %s5 = inlined_call_operand.hbm [shape: f32[16,128], index: 5, kind: output, shape index: {}]
  %s6 = sld [smem:[#allocation0]]
  $region65: #{tpu_custom_call.1} parent=0
    _
  %s8 = ssub.s32 1, %s6
  %s9 = scalar_select 0, %s8, %s6
  $region1: #{tpu_custom_call.1} parent=0
    #allocation2 [shape = 'u8[8192]{0}', space=vmem, size = 0x2000, scoped, tag = 'input window, operand 0']
    #allocation3 [shape = 's32[2]{0}', space=sflag, size = 0x8, scoped, tag = 'scoped memory for tpu_custom_call.1']
    #allocation4 [shape = 's32[2]{0}', space=sflag, size = 0x8, scoped, tag = 'scoped memory for tpu_custom_call.1']
    #allocation5 [shape = 'u8[8192]{0}', space=vmem, size = 0x2000, scoped, tag = 'input window, operand 1, single buffered']
    #allocation6 [shape = 's32[1]{0}', space=sflag, size = 0x4, scoped, tag = 'scoped memory for tpu_custom_call.1']
    #allocation7 [shape = 'u8[32768]{0}', space=vmem, size = 0x8000, scoped, tag = 'input window, operand 3, single buffered']
    #allocation8 [shape = 'u8[8192]{0}', space=vmem, size = 0x2000, scoped, tag = 'output window, operand 0']
    %10 = vsyncpa [#allocation3], 0
    %s11 = scalar_lea.sflag [#allocation3], 1
    %12 = vsyncpa %s11, 0
    %13 = vsyncpa [#allocation6], 0
    %14 = vsyncpa [#allocation4], 0
    %s15 = scalar_lea.sflag [#allocation4], 1
    %16 = vsyncpa %s15, 0
    loop: start=0, step=1, limit=4
    $region2: #{tpu_custom_call.1} parent=1 // loop_pre_header
      _
    $region3: #{tpu_custom_call.1} parent=1 // loop_header
      %s18 = sphi 0, %s22
      %p19 = scmp.ge.s32.totalorder %s18, 4
      %s28 = sphi 0, %s30
      %s31 = sphi 0, %s28
      %s32 = sphi 0, %s31
      %s48 = sphi 0, %s32
      %s52 = sphi 0, %s52
      %s54 = sphi 0, %s52
      %s55 = sphi 0, %s54
      %s69 = sphi 0, %s55
      %s73 = sphi 0, %s73
      %s75 = sphi 0, %s73
      %s76 = sphi 0, %s75
      %s90 = sphi 0, %s76
      %s94 = sphi 0, %s94
      %s96 = sphi 0, %s94
      %s97 = sphi 0, %s96
      %s111 = sphi 0, %s97
      %s115 = sphi 0, %s115
      %s117 = sphi 0, %s115
      %s118 = sphi 0, %s117
      %s132 = sphi 0, %s118
      %s138 = sphi 0, %s140
      %s141 = sphi 0, %s138
      %s142 = sphi 0, %s141
      %s158 = sphi 0, %s142
    $region4: #{tpu_custom_call.1} parent=1 // loop_header_branch
      %21 = sbr.rel (%p19) target = $region8
    $region5: #{tpu_custom_call.1} parent=1 // loop_body
      %s23 = ssub.s32 %s18, 1
      %s24 = ssub.s32 %s18, 2
      %s25 = sadd.s32 %s18, 1
      %s26 = ssub.s32 %s18, %s25
      %p27 = scmp.eq.s32.totalorder %s26, 0
      %s29 = sadd.s32 %s28, 1
      %s30 = scalar_select %p27, %s28, %s29
      %p33 = pneg %p27
      %p34 = scmp.eq.s32.totalorder %s18, 1
      %p35 = por %p33, %p34
      %p36 = scmp.ne.s32.totalorder %s28, %s31
      %p37 = scmp.eq.s32.totalorder %s18, 0
      %p38 = por %p36, %p37
      %p39 = scmp.ne.s32.totalorder %s28, %s31
      %p40 = scmp.eq.s32.totalorder %s23, 1
      %p41 = por %p39, %p40
      %p42 = scmp.ne.s32.totalorder %s31, %s32
      %p43 = scmp.eq.s32.totalorder %s23, 0
      %p44 = por %p42, %p43
      %p45 = scmp.ne.s32.totalorder %s31, %s32
      %p46 = scmp.eq.s32.totalorder %s24, 1
      %p47 = por %p45, %p46
      %p49 = scmp.ne.s32.totalorder %s32, %s48
      %p50 = scmp.eq.s32.totalorder %s24, 0
      %p51 = por %p49, %p50
      %s53 = sadd.s32 %s52, 1
      %p56 = scmp.eq.s32.totalorder %s18, 1
      %p57 = scmp.ne.s32.totalorder %s52, %s54
      %p58 = scmp.eq.s32.totalorder %s18, 0
      %p59 = por %p57, %p58
      %p60 = scmp.ne.s32.totalorder %s52, %s54
      %p61 = scmp.eq.s32.totalorder %s23, 1
      %p62 = por %p60, %p61
      %p63 = scmp.ne.s32.totalorder %s54, %s55
      %p64 = scmp.eq.s32.totalorder %s23, 0
      %p65 = por %p63, %p64
      %p66 = scmp.ne.s32.totalorder %s54, %s55
      %p67 = scmp.eq.s32.totalorder %s24, 1
      %p68 = por %p66, %p67
      %p70 = scmp.ne.s32.totalorder %s55, %s69
      %p71 = scmp.eq.s32.totalorder %s24, 0
      %p72 = por %p70, %p71
      %s74 = sadd.s32 %s73, 1
      %p77 = scmp.eq.s32.totalorder %s18, 1
      %p78 = scmp.ne.s32.totalorder %s73, %s75
      %p79 = scmp.eq.s32.totalorder %s18, 0
      %p80 = por %p78, %p79
      %p81 = scmp.ne.s32.totalorder %s73, %s75
      %p82 = scmp.eq.s32.totalorder %s23, 1
      %p83 = por %p81, %p82
      %p84 = scmp.ne.s32.totalorder %s75, %s76
      %p85 = scmp.eq.s32.totalorder %s23, 0
      %p86 = por %p84, %p85
      %p87 = scmp.ne.s32.totalorder %s75, %s76
      %p88 = scmp.eq.s32.totalorder %s24, 1
      %p89 = por %p87, %p88
      %p91 = scmp.ne.s32.totalorder %s76, %s90
      %p92 = scmp.eq.s32.totalorder %s24, 0
      %p93 = por %p91, %p92
      %s95 = sadd.s32 %s94, 1
      %p98 = scmp.eq.s32.totalorder %s18, 1
      %p99 = scmp.ne.s32.totalorder %s94, %s96
      %p100 = scmp.eq.s32.totalorder %s18, 0
      %p101 = por %p99, %p100
      %p102 = scmp.ne.s32.totalorder %s94, %s96
      %p103 = scmp.eq.s32.totalorder %s23, 1
      %p104 = por %p102, %p103
      %p105 = scmp.ne.s32.totalorder %s96, %s97
      %p106 = scmp.eq.s32.totalorder %s23, 0
      %p107 = por %p105, %p106
      %p108 = scmp.ne.s32.totalorder %s96, %s97
      %p109 = scmp.eq.s32.totalorder %s24, 1
      %p110 = por %p108, %p109
      %p112 = scmp.ne.s32.totalorder %s97, %s111
      %p113 = scmp.eq.s32.totalorder %s24, 0
      %p114 = por %p112, %p113
      %s116 = sadd.s32 %s115, 1
      %p119 = scmp.eq.s32.totalorder %s18, 1
      %p120 = scmp.ne.s32.totalorder %s115, %s117
      %p121 = scmp.eq.s32.totalorder %s18, 0
      %p122 = por %p120, %p121
      %p123 = scmp.ne.s32.totalorder %s115, %s117
      %p124 = scmp.eq.s32.totalorder %s23, 1
      %p125 = por %p123, %p124
      %p126 = scmp.ne.s32.totalorder %s117, %s118
      %p127 = scmp.eq.s32.totalorder %s23, 0
      %p128 = por %p126, %p127
      %p129 = scmp.ne.s32.totalorder %s117, %s118
      %p130 = scmp.eq.s32.totalorder %s24, 1
      %p131 = por %p129, %p130
      %p133 = scmp.ne.s32.totalorder %s118, %s132
      %p134 = scmp.eq.s32.totalorder %s24, 0
      %p135 = por %p133, %p134
      %s136 = ssub.s32 %s18, %s25
      %p137 = scmp.eq.s32.totalorder %s136, 0
      %s139 = sadd.s32 %s138, 1
      %s140 = scalar_select %p137, %s138, %s139
      %p143 = pneg %p137
      %p144 = scmp.eq.s32.totalorder %s18, 1
      %p145 = por %p143, %p144
      %p146 = scmp.ne.s32.totalorder %s138, %s141
      %p147 = scmp.eq.s32.totalorder %s18, 0
      %p148 = por %p146, %p147
      %p149 = scmp.ne.s32.totalorder %s138, %s141
      %p150 = scmp.eq.s32.totalorder %s23, 1
      %p151 = por %p149, %p150
      %p152 = scmp.ne.s32.totalorder %s141, %s142
      %p153 = scmp.eq.s32.totalorder %s23, 0
      %p154 = por %p152, %p153
      %p155 = scmp.ne.s32.totalorder %s141, %s142
      %p156 = scmp.eq.s32.totalorder %s24, 1
      %p157 = por %p155, %p156
      %p159 = scmp.ne.s32.totalorder %s142, %s158
      %p160 = scmp.eq.s32.totalorder %s24, 0
      %p161 = por %p159, %p160
      %p162 = scmp.le.s32.totalorder 1, %s18
      %p163 = scmp.lt.s32.totalorder %s18, 3
      %p164 = pnand %p162, %p163
      %p165 = pneg %p164
      // Predicated region
      $region9: #{tpu_custom_call.1} parent=5 // pred_check
        _
      $region10: #{tpu_custom_call.1} parent=5 // pred_check_branch
        %167 = sbr.rel (%p164) target = $region12
      $region11: #{tpu_custom_call.1} parent=5 // pred_region
        %s168 = ssub.s32 %s18, 1
        // Predicated region
        $region13: #{tpu_custom_call.1} parent=11 // pred_check
          %p169 = pneg %p65
        $region14: #{tpu_custom_call.1} parent=11 // pred_check_branch
          %171 = sbr.rel (%p169) target = $region16
        $region15: #{tpu_custom_call.1} parent=11 // pred_region
          %s173 = ssub.s32 256, 256
          %174 = vsyncadd [#allocation6], %s173
          %s175 = sshll.u32 [#allocation5], 4
          %s176 = int_to_ptr.vmem [resolvable:$true] %s175
          %181 = dma.hbm_to_vmem [thread:$0]  %s1, 256, %s176, [#allocation6], 64, 64, 4
        $region16: #{tpu_custom_call.1} parent=11 // pred_fallthru
          _
        // Predicated region
        $region17: #{tpu_custom_call.1} parent=11 // pred_check
          %p182 = pneg %p86
        $region18: #{tpu_custom_call.1} parent=11 // pred_check_branch
          %184 = sbr.rel (%p182) target = $region20
        $region19: #{tpu_custom_call.1} parent=11 // pred_region
          _
        $region20: #{tpu_custom_call.1} parent=11 // pred_fallthru
          _
        // Predicated region
        $region21: #{tpu_custom_call.1} parent=11 // pred_check
          %p185 = pneg %p107
        $region22: #{tpu_custom_call.1} parent=11 // pred_check_branch
          %187 = sbr.rel (%p185) target = $region24
        $region23: #{tpu_custom_call.1} parent=11 // pred_region
          %s189 = ssub.s32 1024, 1024
          %190 = vsyncadd [#allocation6], %s189
          %s191 = sshll.u32 [#allocation7], 4
          %s192 = int_to_ptr.vmem [resolvable:$true] %s191
          %197 = dma.hbm_to_vmem [thread:$0]  %s3, 1024, %s192, [#allocation6], 64, 64, 4
        $region24: #{tpu_custom_call.1} parent=11 // pred_fallthru
          _
        // Predicated region
        $region25: #{tpu_custom_call.1} parent=11 // pred_check
          %p198 = pneg %p128
        $region26: #{tpu_custom_call.1} parent=11 // pred_check_branch
          %200 = sbr.rel (%p198) target = $region28
        $region27: #{tpu_custom_call.1} parent=11 // pred_region
          _
        $region28: #{tpu_custom_call.1} parent=11 // pred_fallthru
          _
      $region12: #{tpu_custom_call.1} parent=5 // pred_fallthru
        _
      %p201 = scmp.lt.s32.totalorder %s18, 2
      // Predicated region
      $region29: #{tpu_custom_call.1} parent=5 // pred_check
        %p202 = pneg %p201
      $region30: #{tpu_custom_call.1} parent=5 // pred_check_branch
        %204 = sbr.rel (%p202) target = $region32
      $region31: #{tpu_custom_call.1} parent=5 // pred_region
        // Predicated region
        $region33: #{tpu_custom_call.1} parent=31 // pred_check
          %p205 = pneg %p38
        $region34: #{tpu_custom_call.1} parent=31 // pred_check_branch
          %207 = sbr.rel (%p205) target = $region36
        $region35: #{tpu_custom_call.1} parent=31 // pred_region
          %s208 = sand.u32 %s28, 1
          %s209 = scalar_lea.sflag [#allocation3], %s208
          %s210 = sand.u32 %s28, 1
          %s211 = smul.addr %s210, 8
          %s212 = scalar_lea.vmem [#allocation2], %s211
          %s214 = ssub.s32 128, 128
          %215 = vsyncadd %s209, %s214
          %s216 = smul.addr %s18, 128
          %s217 = scalar_lea.hbm %s0, %s216
          %s219 = sshll.u32 %s212, 4
          %s220 = int_to_ptr.vmem [resolvable:$true] %s219
          %222 = dma.hbm_to_vmem [thread:$0]  %s217, 128, %s220, %s209
        $region36: #{tpu_custom_call.1} parent=31 // pred_fallthru
          _
      $region32: #{tpu_custom_call.1} parent=5 // pred_fallthru
        _
      %p223 = scmp.le.s32.totalorder 1, %s18
      %p224 = scmp.lt.s32.totalorder %s18, 3
      %p225 = pnand %p223, %p224
      %p226 = pneg %p225
      // Predicated region
      $region37: #{tpu_custom_call.1} parent=5 // pred_check
        _
      $region38: #{tpu_custom_call.1} parent=5 // pred_check_branch
        %228 = sbr.rel (%p225) target = $region40
      $region39: #{tpu_custom_call.1} parent=5 // pred_region
        %s229 = ssub.s32 %s18, 1
        %s230 = sand.u32 %s31, 1
        %s231 = scalar_lea.sflag [#allocation3], %s230
        %s232 = sand.u32 %s31, 1
        %s233 = smul.addr %s232, 8
        %s234 = scalar_lea.vmem [#allocation2], %s233
        // Predicated region
        $region41: #{tpu_custom_call.1} parent=39 // pred_check
          %p235 = pneg %p44
        $region42: #{tpu_custom_call.1} parent=39 // pred_check_branch
          %237 = sbr.rel (%p235) target = $region44
        $region43: #{tpu_custom_call.1} parent=39 // pred_region
          %238 = dma.done %s231, 128
        $region44: #{tpu_custom_call.1} parent=39 // pred_fallthru
          _
        // Predicated region
        $region45: #{tpu_custom_call.1} parent=39 // pred_check
          %p239 = pneg %p65
        $region46: #{tpu_custom_call.1} parent=39 // pred_check_branch
          %241 = sbr.rel (%p239) target = $region48
        $region47: #{tpu_custom_call.1} parent=39 // pred_region
          %242 = dma.done [#allocation6], 256
        $region48: #{tpu_custom_call.1} parent=39 // pred_fallthru
          _
        // Predicated region
        $region49: #{tpu_custom_call.1} parent=39 // pred_check
          %p243 = pneg %p107
        $region50: #{tpu_custom_call.1} parent=39 // pred_check_branch
          %245 = sbr.rel (%p243) target = $region52
        $region51: #{tpu_custom_call.1} parent=39 // pred_region
          %246 = dma.done [#allocation6], 1024
        $region52: #{tpu_custom_call.1} parent=39 // pred_fallthru
          _
        %s247 = sand.u32 %s31, 1
        %s248 = scalar_lea.sflag [#allocation3], %s247
        %s249 = sand.u32 %s31, 1
        %s250 = smul.addr %s249, 8
        %s251 = scalar_lea.vmem [#allocation2], %s250
        %p252 = pneg %p44
        %p253 = pneg %p41
        %p254 = pneg %p65
        %p255 = pneg %p62
        %p256 = pneg %p86
        %p257 = pneg %p83
        %p258 = pneg %p107
        %p259 = pneg %p104
        %p260 = pneg %p128
        %p261 = pneg %p125
        %p262 = pneg %p154
        %p263 = pneg %p151
        %s264 = sand.u32 %s141, 1
        %s265 = scalar_lea.sflag [#allocation4], %s264
        %s266 = sand.u32 %s141, 1
        %s267 = smul.addr %s266, 8
        %s268 = scalar_lea.vmem [#allocation8], %s267
        %v270 = vld [vmem:[%s234] sm:$0xff]
        %v271 = vpack.c.bf16 %v270, %v270
        %v272 = vld [vmem:[#allocation5] sm:$0xf]
        %v273 = vld [vmem:[#allocation5 + $0x4] sm:$0xf]
        %v274 = vld [vmem:[#allocation5 + $0x8] sm:$0xf]
        %v275 = vld [vmem:[#allocation5 + $0xc] sm:$0xf]
        %v276 = vld [vmem:[%s2] sm:$0x1]
        %v278 = vlaneseq
        %v279 = vshrl.u32 %v278, 7
        %v280 = vsub.s32 0, %v279
        %v281 = vrot.slane %v276, %v280
        %v287 = vunpack.c.l.b16 %v272
        %v288 = vunpack.c.l.b16 %v273
        %v289 = vunpack.c.l.b16 %v274
        %v290 = vunpack.c.l.b16 %v275
        %v291 = vpack.c.b16 %v288, %v287
        %v292 = vpack.c.b16 %v290, %v289
        %vm295 = vcmask 261120
        %v297 = vsel %vm295, %v271, 0
        %299 = vmatprep.subr.bf16.mxu0 0
        %300 = vmatpush1.bf16.msra.mxu0 %v291
        %301 = vmatprep.subr.bf16.mxu0 0
        %302 = vmatpush1.bf16.msra.mxu0 %v292
        %303 = vmatprep.subr.bf16.mxu0 0
        %304 = vmatpush1.bf16.msra.mxu0 0
        %305 = vmatprep.subr.bf16.mxu0 0
        %306 = vmatpush1.bf16.msra.mxu0 0
        %307 = vmatprep.subr.bf16.mxu0 0
        %308 = vmatpush1.bf16.msra.mxu0 0
        %309 = vmatprep.subr.bf16.mxu0 0
        %310 = vmatpush1.bf16.msra.mxu0 0
        %311 = vmatprep.subr.bf16.mxu0 0
        %312 = vmatpush1.bf16.msra.mxu0 0
        %313 = vmatprep.subr.bf16.mxu0 0
        %314 = vmatpush1.bf16.msra.mxu0 0
        %315 = vmatprep.subr.bf16.mxu0 0
        %316 = vmatpush1.bf16.msra.mxu0 0
        %317 = vmatprep.subr.bf16.mxu0 0
        %318 = vmatpush1.bf16.msra.mxu0 0
        %319 = vmatprep.subr.bf16.mxu0 0
        %320 = vmatpush1.bf16.msra.mxu0 0
        %321 = vmatprep.subr.bf16.mxu0 0
        %322 = vmatpush1.bf16.msra.mxu0 0
        %323 = vmatprep.subr.bf16.mxu0 0
        %324 = vmatpush1.bf16.msra.mxu0 0
        %325 = vmatprep.subr.bf16.mxu0 0
        %326 = vmatpush1.bf16.msra.mxu0 0
        %327 = vmatprep.subr.bf16.mxu0 0
        %328 = vmatpush1.bf16.msra.mxu0 0
        %329 = vmatprep.subr.bf16.mxu0 0
        %330 = vmatpush1.bf16.msra.mxu0 0
        %331 = vmatprep.mubr.bf16.mxu0 0
        %332 = vmatmul.mubr.bf16.gmra.mrb[0].mxu0 %v297
        %v333 = vpop.f32.mrb[0].mxu0
        %v334 = vadd.f32 %v281, %v333
        %v335 = vpop.f32.mrb[0].mxu0
        %v336 = vpop.f32.mrb[0].mxu0
        %v337 = vpop.f32.mrb[0].mxu0
        %338 = vdwg.mxu0
        %v339 = vmul.f32 %v334, 0.70710677
        %v340 = verf.f32.pop %v339
        %v341 = vadd.f32 %v340, 1.0
        %v342 = vmul.f32 %v341, 0.5
        %v343 = vmul.f32 %v334, %v342
        %v344 = vpack.c.bf16 %v343, %v343
        %v345 = vld [vmem:[#allocation7] sm:$0xf]
        %v346 = vld [vmem:[#allocation7 + $0x4] sm:$0xf]
        %v347 = vld [vmem:[#allocation7 + $0x8] sm:$0xf]
        %v348 = vld [vmem:[#allocation7 + $0xc] sm:$0xf]
        %v349 = vld [vmem:[#allocation7 + $0x10] sm:$0xf]
        %v350 = vld [vmem:[#allocation7 + $0x14] sm:$0xf]
        %v351 = vld [vmem:[#allocation7 + $0x18] sm:$0xf]
        %v352 = vld [vmem:[#allocation7 + $0x1c] sm:$0xf]
        %v353 = vld [vmem:[#allocation7 + $0x20] sm:$0xf]
        %v354 = vld [vmem:[#allocation7 + $0x24] sm:$0xf]
        %v355 = vld [vmem:[#allocation7 + $0x28] sm:$0xf]
        %v356 = vld [vmem:[#allocation7 + $0x2c] sm:$0xf]
        %v357 = vld [vmem:[#allocation7 + $0x30] sm:$0xf]
        %v358 = vld [vmem:[#allocation7 + $0x34] sm:$0xf]
        %v359 = vld [vmem:[#allocation7 + $0x38] sm:$0xf]
        %v360 = vld [vmem:[#allocation7 + $0x3c] sm:$0xf]
        %v361 = vld [vmem:[%s4] sm:$0x1]
        %v363 = vlaneseq
        %v364 = vshrl.u32 %v363, 7
        %v365 = vsub.s32 0, %v364
        %v366 = vrot.slane %v361, %v365
        %v384 = vunpack.c.l.b16 %v345
        %v385 = vunpack.c.l.b16 %v346
        %v386 = vunpack.c.l.b16 %v347
        %v387 = vunpack.c.l.b16 %v348
        %v388 = vunpack.c.l.b16 %v349
        %v389 = vunpack.c.l.b16 %v350
        %v390 = vunpack.c.l.b16 %v351
        %v391 = vunpack.c.l.b16 %v352
        %v392 = vunpack.c.l.b16 %v353
        %v393 = vunpack.c.l.b16 %v354
        %v394 = vunpack.c.l.b16 %v355
        %v395 = vunpack.c.l.b16 %v356
        %v396 = vunpack.c.l.b16 %v357
        %v397 = vunpack.c.l.b16 %v358
        %v398 = vunpack.c.l.b16 %v359
        %v399 = vunpack.c.l.b16 %v360
        %v400 = vpack.c.b16 %v385, %v384
        %v401 = vpack.c.b16 %v387, %v386
        %v402 = vpack.c.b16 %v389, %v388
        %v403 = vpack.c.b16 %v391, %v390
        %v404 = vpack.c.b16 %v393, %v392
        %v405 = vpack.c.b16 %v395, %v394
        %v406 = vpack.c.b16 %v397, %v396
        %v407 = vpack.c.b16 %v399, %v398
        %416 = vmatprep.subr.bf16.mxu0 0
        %417 = vmatpush1.bf16.msra.mxu0 %v400
        %418 = vmatprep.subr.bf16.mxu0 0
        %419 = vmatpush1.bf16.msra.mxu0 %v401
        %420 = vmatprep.subr.bf16.mxu0 0
        %421 = vmatpush1.bf16.msra.mxu0 %v402
        %422 = vmatprep.subr.bf16.mxu0 0
        %423 = vmatpush1.bf16.msra.mxu0 %v403
        %424 = vmatprep.subr.bf16.mxu0 0
        %425 = vmatpush1.bf16.msra.mxu0 %v404
        %426 = vmatprep.subr.bf16.mxu0 0
        %427 = vmatpush1.bf16.msra.mxu0 %v405
        %428 = vmatprep.subr.bf16.mxu0 0
        %429 = vmatpush1.bf16.msra.mxu0 %v406
        %430 = vmatprep.subr.bf16.mxu0 0
        %431 = vmatpush1.bf16.msra.mxu0 %v407
        %432 = vmatprep.subr.bf16.mxu0 0
        %433 = vmatpush1.bf16.msra.mxu0 0
        %434 = vmatprep.subr.bf16.mxu0 0
        %435 = vmatpush1.bf16.msra.mxu0 0
        %436 = vmatprep.subr.bf16.mxu0 0
        %437 = vmatpush1.bf16.msra.mxu0 0
        %438 = vmatprep.subr.bf16.mxu0 0
        %439 = vmatpush1.bf16.msra.mxu0 0
        %440 = vmatprep.subr.bf16.mxu0 0
        %441 = vmatpush1.bf16.msra.mxu0 0
        %442 = vmatprep.subr.bf16.mxu0 0
        %443 = vmatpush1.bf16.msra.mxu0 0
        %444 = vmatprep.subr.bf16.mxu0 0
        %445 = vmatpush1.bf16.msra.mxu0 0
        %446 = vmatprep.subr.bf16.mxu0 0
        %447 = vmatpush1.bf16.msra.mxu0 0
        %448 = vmatprep.mubr.bf16.mxu0 0
        %449 = vmatmul.mubr.bf16.gmra.mrb[0].mxu0 %v344
        %v450 = vpop.f32.mrb[0].mxu0
        %v451 = vadd.f32 %v366, %v450
        %v452 = vpop.f32.mrb[0].mxu0
        %v453 = vpop.f32.mrb[0].mxu0
        %v454 = vpop.f32.mrb[0].mxu0
        %455 = vdwg.mxu0
        %456 = vst [vmem:[%s268] sm:$0xff] %v451
        %s457 = sand.u32 %s141, 1
        %s458 = scalar_lea.sflag [#allocation4], %s457
        %s459 = sand.u32 %s141, 1
        %s460 = smul.addr %s459, 8
        %s461 = scalar_lea.vmem [#allocation8], %s460
        // Predicated region
        $region53: #{tpu_custom_call.1} parent=39 // pred_check
          %p462 = pneg %p151
        $region54: #{tpu_custom_call.1} parent=39 // pred_check_branch
          %464 = sbr.rel (%p462) target = $region56
        $region55: #{tpu_custom_call.1} parent=39 // pred_region
          %s466 = ssub.s32 128, 128
          %467 = vsyncadd %s458, %s466
          %s468 = smul.addr %s23, 128
          %s469 = scalar_lea.hbm %s5, %s468
          %s471 = sshll.u32 %s461, 4
          %s472 = int_to_ptr.vmem [resolvable:$true] %s471
          %474 = dma.vmem_to_hbm [thread:$0]  %s472, 128, %s469, %s458
        $region56: #{tpu_custom_call.1} parent=39 // pred_fallthru
          _
      $region40: #{tpu_custom_call.1} parent=5 // pred_fallthru
        _
      %p475 = scmp.le.s32.totalorder 2, %s18
      // Predicated region
      $region57: #{tpu_custom_call.1} parent=5 // pred_check
        %p476 = pneg %p475
      $region58: #{tpu_custom_call.1} parent=5 // pred_check_branch
        %478 = sbr.rel (%p476) target = $region60
      $region59: #{tpu_custom_call.1} parent=5 // pred_region
        %s479 = ssub.s32 %s18, 2
        // Predicated region
        $region61: #{tpu_custom_call.1} parent=59 // pred_check
          %p480 = pneg %p157
        $region62: #{tpu_custom_call.1} parent=59 // pred_check_branch
          %482 = sbr.rel (%p480) target = $region64
        $region63: #{tpu_custom_call.1} parent=59 // pred_region
          %s483 = sand.u32 %s142, 1
          %s484 = scalar_lea.sflag [#allocation4], %s483
          %s485 = sand.u32 %s142, 1
          %s486 = smul.addr %s485, 8
          %s487 = scalar_lea.vmem [#allocation8], %s486
          %488 = dma.done %s484, 128
        $region64: #{tpu_custom_call.1} parent=59 // pred_fallthru
          _
      $region60: #{tpu_custom_call.1} parent=5 // pred_fallthru
        _
    $region6: #{tpu_custom_call.1} parent=1 // loop_footer
      %s22 = sadd.s32 1, %s18
    $region7: #{tpu_custom_call.1} parent=1 // loop_footer_branch
      %17 = sbr.rel target = $region3
    $region8: #{tpu_custom_call.1} parent=1 // loop_exit
      _
    %489 = vsyncpa [#allocation3], 1
    %s490 = scalar_lea.sflag [#allocation3], 1
    %491 = vsyncpa %s490, 1
    %492 = vsyncpa [#allocation6], 1
    %493 = vsyncpa [#allocation4], 1
    %s494 = scalar_lea.sflag [#allocation4], 1
    %495 = vsyncpa %s494, 1

</llo_original>
